<compile_context>
chip_gen: v6e
topology: v6e:2x2x1
jax: 0.10.0
libtpu: 0.0.40
codegen_flags: <defaults>
</compile_context>

<pallas_src>
import functools

import jax
import jax.numpy as jnp
import numpy as np
from jax.experimental import pallas as pl
from jax.experimental.pallas import tpu as pltpu

# ----------------------------- configuration --------------------------------
ROOT_POS_DIM = 3
POS_DIM = 69
VELOCITY_DIM = 72
VEL_FACTOR_DIM = 5
P = ROOT_POS_DIM + POS_DIM          # 72  (position features)
V = VELOCITY_DIM                    # 72  (velocity features)
F = VEL_FACTOR_DIM                  # 5   (velocity-factor features)
JOINT_NUM = P // 3                  # 24

_WEIGHT = [1, 2, 3, 4, 1, 2, 3, 4, 1, 1, 1, 1, 1, 1, 2, 3, 4, 1, 2, 3, 4, 1, 2, 1]
_PARTS = [1, 1, 1, 1, 2, 2, 2, 2, 0, 0, 0, 0, 0, 3, 3, 3, 3, 4, 4, 4, 4, 0, 0, 0]


def _make_static_mats_np():
    """0/1 joint selector [P, J] and part-normalized weight matrix [J, F]."""
    sel = np.zeros((P, JOINT_NUM), dtype=np.float32)
    for j in range(JOINT_NUM):
        sel[3 * j: 3 * j + 3, j] = 1.0
    weight_sum = [0.0] * F
    for j in range(JOINT_NUM):
        weight_sum[_PARTS[j]] += _WEIGHT[j]
    wt = np.zeros((JOINT_NUM, F), dtype=np.float32)
    for j in range(JOINT_NUM):
        wt[j, _PARTS[j]] = _WEIGHT[j] / weight_sum[_PARTS[j]]
    return sel, wt


def _choose_tiling(num_seqs, seq_len, target_rows):
    """Pick (core_splits, seqs_per_tile, tiles_per_split).

    Tiles always contain whole sequences (so the in-tile roll wrap always
    lands on a masked t==0 row) and, unless we fall back to a single resident
    block, a multiple of 8 rows (sublane tiling constraint).
    """
    def best_g(nseq):
        cands = [g for g in range(1, nseq + 1)
                 if nseq % g == 0 and (seq_len * g) % 8 == 0]
        if not cands:
            return None
        within = [g for g in cands if seq_len * g <= target_rows]
        return max(within) if within else min(cands)

    for splits in (2, 1):                       # 2-way split feeds v7x's 2 TCs
        if num_seqs % splits:
            continue
        g = best_g(num_seqs // splits)
        if g is not None:
            return splits, g, (num_seqs // splits) // g
    # Fallback: one resident block (no 8-row-aligned whole-sequence tile).
    return 1, num_seqs, 1


# ------------------------------- the kernel ---------------------------------
def _velocity_loss_kernel(seq_ref, tvf_ref, combo_ref, sel_ref, wt_ref,
                          acc1_ref, acc2_ref, *,
                          seq_len, tile_rows, tiles_per_split, c1a, c1b, c2):
    s = pl.program_id(0)            # core split (parallel)
    k = pl.program_id(1)            # row tile inside the split (reduction)

    # Output blocks are revisited across k -> they ARE the accumulators.
    @pl.when(k == 0)
    def _():
        acc1_ref[...] = jnp.zeros_like(acc1_ref)
        acc2_ref[...] = jnp.zeros_like(acc2_ref)

    x = seq_ref[...].astype(jnp.float32)        # [rows, P+V] (bf16 on wire ok)
    tvf = tvf_ref[...].astype(jnp.float32)      # [rows, F]
    rows = x.shape[0]

    pred_pos = x[:, :P]                         # normalized positions
    pred_vel = x[:, P:]                         # predicted velocities

    # Global row index -> time index within its sequence.
    row0 = (s * tiles_per_split + k) * tile_rows
    n_idx = row0 + jax.lax.broadcasted_iota(jnp.int32, (rows, 1), 0)
    if (seq_len & (seq_len - 1)) == 0:          # power-of-two T: cheap AND
        t_idx = jnp.bitwise_and(n_idx, seq_len - 1)
    else:
        t_idx = jax.lax.rem(n_idx, seq_len)
    is_t0 = t_idx == 0                          # [rows, 1] bool

    # Finite-difference velocity: the de-normalization mean cancels, so the
    # difference of normalized positions times a folded scale is exact.  The
    # roll's wrap row is always a t==0 row (tiles hold whole sequences) and is
    # removed with a NaN-safe select.
    prev_pos = pltpu.roll(pred_pos, shift=1, axis=0)
    diff = jnp.where(is_t0, 0.0, pred_pos - prev_pos)          # [rows, P]

    # vel_n = (diff*std_pos - mean_vel)/std_vel == diff*scale + bias (folded).
    vel_n = diff * combo_ref[0:1, :] + combo_ref[1:2, :]       # [rows, V]
    vel_target = jnp.where(is_t0, 0.0, vel_n)                  # target is 0 at t==0

    # loss1 (both MSE terms in one pass, means folded into c1a/c1b):
    err1 = pred_vel - vel_target
    w1 = jnp.where(is_t0, c1b, c1a)                            # [rows, 1]
    contrib1 = err1 * err1 * w1                                # [rows, V]

    # Velocity factor: per-joint speed via a tiny MXU matmul against the
    # std^2-folded selector, then part-weighted sum with the vel-factor
    # normalization folded into the weight matrix (last row = bias).
    dsq = diff * diff
    speed = jnp.sqrt(jnp.dot(dsq, sel_ref[...],
                             preferred_element_type=jnp.float32))   # [rows, J]
    vf_n = jnp.dot(speed, wt_ref[:JOINT_NUM, :],
                   preferred_element_type=jnp.float32) + wt_ref[JOINT_NUM:, :]
    d2 = tvf - vf_n
    contrib2 = jnp.where(is_t0, 0.0, d2 * d2 * c2)              # [rows, F]

    # Deferred reduction: fold rows into 8 sublane bins with VPU adds only;
    # the single cross-lane/sublane reduction happens once, in the wrapper.
    if rows % 8 == 0:
        acc1_ref[...] += jnp.sum(contrib1.reshape(rows // 8, 8, V), axis=0)
        acc2_ref[...] += jnp.sum(contrib2.reshape(rows // 8, 8, F), axis=0)
    else:  # single-resident-block fallback with a non-8-aligned row count
        acc1_ref[0:1, :] += jnp.sum(contrib1, axis=0, keepdims=True)
        acc2_ref[0:1, :] += jnp.sum(contrib2, axis=0, keepdims=True)


# ------------------------------- wrapper -------------------------------------
@functools.partial(jax.jit, static_argnames=("target_rows",))
def velocity_loss(predict_seq, train_x1, true_vel_factor, mean, std, *,
                  target_rows=2048):
    # train_x1 only feeds the velocity at t==0, which no loss term consumes,
    # so it never needs to reach the kernel.
    del train_x1

    B, T, DP = predict_seq.shape
    assert DP == P + V, f"predict_seq feature dim must be {P + V}"
    assert T >= 2, "sequence length must be >= 2 (loss divides by T-1)"
    assert true_vel_factor.shape[1] >= T

    mean = mean.astype(jnp.float32)
    std = std.astype(jnp.float32)

    N = B * T
    # predict_seq / true_vel_factor keep their wire dtype (bf16 supported);
    # the kernel upcasts after load, so bf16 producers halve HBM traffic.
    seq2 = predict_seq.reshape(N, DP)
    tvf2 = true_vel_factor[:, :T, :].reshape(N, F)

    std_pos = std[:P]
    mean_vel = mean[-(V + F):-F]
    std_vel = std[-(V + F):-F]
    mean_vf = mean[-F:]
    std_vf = std[-F:]
    inv_std_vel = 1.0 / std_vel
    inv_std_vf = 1.0 / std_vf

    # (diff*std_pos - mean_vel)/std_vel  ==  diff*scale + bias
    combo = jnp.stack([std_pos * inv_std_vel, -mean_vel * inv_std_vel], axis=0)  # [2, V]

    sel_np, wt_np = _make_static_mats_np()
    sel_std2 = jnp.asarray(sel_np) * (std_pos * std_pos)[:, None]                # [P, J]
    wt_aug = jnp.concatenate(
        [jnp.asarray(wt_np) * inv_std_vf[None, :],
         (-mean_vf * inv_std_vf)[None, :]], axis=0)                              # [J+1, F]

    # All MSE means + loss weights folded into three static coefficients.
    c1a = 2.0 * 10.0 / (B * (T - 1) * V)
    c1b = 2.0 * 20.0 / (B * V)
    c2 = 1.5 * 10.0 / (B * (T - 1) * F)

    S, seqs_per_tile, K = _choose_tiling(B, T, target_rows)
    tile_rows = seqs_per_tile * T

    kernel = functools.partial(
        _velocity_loss_kernel, seq_len=T, tile_rows=tile_rows,
        tiles_per_split=K, c1a=c1a, c1b=c1b, c2=c2)

    row_block = lambda s, k: (s * K + k, 0)      # noqa: E731
    const_block = lambda s, k: (0, 0)            # noqa: E731

    acc1, acc2 = pl.pallas_call(
        kernel,
        grid=(S, K),
        in_specs=[
            pl.BlockSpec((tile_rows, DP), row_block),          # streamed seq rows
            pl.BlockSpec((tile_rows, F), row_block),           # streamed true vf rows
            pl.BlockSpec((2, V), const_block),                 # resident scale/bias
            pl.BlockSpec((P, JOINT_NUM), const_block),         # resident selector
            pl.BlockSpec((JOINT_NUM + 1, F), const_block),     # resident weights+bias
        ],
        out_specs=[
            pl.BlockSpec((8, V), lambda s, k: (s, 0)),         # per-split partials
            pl.BlockSpec((8, F), lambda s, k: (s, 0)),
        ],
        out_shape=[
            jax.ShapeDtypeStruct((S * 8, V), jnp.float32),
            jax.ShapeDtypeStruct((S * 8, F), jnp.float32),
        ],
        compiler_params=pltpu.CompilerParams(
            dimension_semantics=("parallel", "arbitrary"),
            vmem_limit_bytes=32 * 1024 * 1024),
    )(seq2, tvf2, combo, sel_std2, wt_aug)

    # Final (tiny) reduction of the deferred partial sums.
    return acc1.sum() + acc2.sum()


# ------------------------- pure-JAX reference (for checking) -----------------
def velocity_loss_ref(predict_seq, train_x1, true_vel_factor, mean, std):
    predict_seq = predict_seq.astype(jnp.float32)
    init_pos = train_x1[:, 0, :P]
    src_pos = predict_seq[..., :P] * std[:P] + mean[:P]
    src_init = init_pos * std[:P] + mean[:P]
    temp = jnp.concatenate([src_init[:, None, :], src_pos], axis=1)
    vel = temp[:, 1:] - temp[:, :-1]
    vel_n = (vel - mean[-(V + F):-F]) / std[-(V + F):-F]

    B, T, _ = vel.shape
    vel3 = vel.reshape(B, T, JOINT_NUM, 3)
    speed = jnp.sqrt(jnp.sum(vel3 * vel3, axis=-1))          # [B, T, J]
    _, wt_np = _make_static_mats_np()
    vf = speed @ jnp.asarray(wt_np)                          # [B, T, F]
    vf_n = (vf - mean[-F:]) / std[-F:]

    pred_vel = predict_seq[:, :, -V:]
    mse = lambda a, b: jnp.mean((a - b) ** 2)                # noqa: E731
    loss1 = mse(pred_vel[:, 1:, :], vel_n[:, 1:, :]) * 10 + \
            mse(pred_vel[:, 0, :], jnp.zeros_like(pred_vel[:, 0, :])) * 20
    loss2 = mse(true_vel_factor[:, 1:-1, :], vf_n[:, 1:, :]) * 10
    return loss1 * 2.0 + loss2 * 1.5


# --------------------------------- main --------------------------------------
if __name__ == "__main__":
    B, T = 4, 8                      # 4 sequences of 8 frames
    D_TOTAL = P + V + F              # 149, full feature vector of mean/std
    D_PRED = P + V                   # 144, predicted features (positions..velocities)

    key = jax.random.PRNGKey(0)
    k1, k2, k3, k4, k5 = jax.random.split(key, 5)

    predict_seq = jax.random.normal(k1, (B, T, D_PRED), dtype=jnp.float32)
    train_x1 = jax.random.normal(k2, (B, T, D_TOTAL), dtype=jnp.float32)
    true_vel_factor = jax.random.normal(k3, (B, T + 1, F), dtype=jnp.float32)
    mean = 0.1 * jax.random.normal(k4, (D_TOTAL,), dtype=jnp.float32)
    std = 0.5 + jax.random.uniform(k5, (D_TOTAL,), dtype=jnp.float32)   # strictly positive

    ref = jax.block_until_ready(
        velocity_loss_ref(predict_seq, train_x1, true_vel_factor, mean, std))

    # Multi-tile path: 2 core splits x 2 row tiles of 8 rows each.
    out_tiled = jax.block_until_ready(
        velocity_loss(predict_seq, train_x1, true_vel_factor, mean, std,
                      target_rows=8))
    # Default tiling: 2 core splits x 1 tile of 16 rows each.
    out_default = jax.block_until_ready(
        velocity_loss(predict_seq, train_x1, true_vel_factor, mean, std))

    np.testing.assert_allclose(np.asarray(out_tiled), np.asarray(ref),
                               rtol=2e-2, atol=1e-3)
    np.testing.assert_allclose(np.asarray(out_default), np.asarray(ref),
                               rtol=2e-2, atol=1e-3)
    print("KERNEL_OK")
</pallas_src>

<mosaic_0001>
module attributes {stable_mosaic.version = 11 : i64} {
  func.func @_velocity_loss_kernel(%arg0: i32, %arg1: i32, %arg2: memref<8x144xf32, #tpu.memory_space<vmem>>, %arg3: memref<8x5xf32, #tpu.memory_space<vmem>>, %arg4: memref<2x72xf32, #tpu.memory_space<vmem>>, %arg5: memref<72x24xf32, #tpu.memory_space<vmem>>, %arg6: memref<25x5xf32, #tpu.memory_space<vmem>>, %arg7: memref<8x72xf32, #tpu.memory_space<vmem>>, %arg8: memref<8x5xf32, #tpu.memory_space<vmem>>) attributes {dimension_semantics = [#tpu.dimension_semantics<parallel>, #tpu.dimension_semantics<arbitrary>], iteration_bounds = array<i64: 2, 2>, scalar_prefetch = 0 : i64, scratch_operands = 0 : i64, tpu.core_type = #tpu.core_type<tc>, window_params = [{transform_indices = @transform_0, window_bounds = array<i64: 8, 144>}, {transform_indices = @transform_1, window_bounds = array<i64: 8, 5>}, {pipeline_mode = #tpu.pipeline_mode<synchronous>, transform_indices = @transform_2, window_bounds = array<i64: 2, 72>}, {pipeline_mode = #tpu.pipeline_mode<synchronous>, transform_indices = @transform_3, window_bounds = array<i64: 72, 24>}, {pipeline_mode = #tpu.pipeline_mode<synchronous>, transform_indices = @transform_4, window_bounds = array<i64: 25, 5>}, {transform_indices = @transform_5, window_bounds = array<i64: 8, 72>}, {transform_indices = @transform_6, window_bounds = array<i64: 8, 5>}]} {
    %c0_i32 = arith.constant 0 : i32
    %0 = arith.cmpi eq, %arg1, %c0_i32 : i32
    %1 = arith.extui %0 : i1 to i32
    %c0_i32_0 = arith.constant 0 : i32
    %2 = arith.cmpi ne, %1, %c0_i32_0 : i32
    scf.if %2 {
      %cst_30 = arith.constant 0.000000e+00 : f32
      %67 = vector.broadcast %cst_30 : f32 to vector<8x72xf32>
      %c0_31 = arith.constant 0 : index
      %c0_32 = arith.constant 0 : index
      %68 = vector.load %arg7[%c0_31, %c0_32] : memref<8x72xf32, #tpu.memory_space<vmem>>, vector<8x72xf32>
      tpu.vector_store %arg7[%c0_31, %c0_32], %67 {strides = array<i32>} : memref<8x72xf32, #tpu.memory_space<vmem>>, vector<8x72xf32>,
      %cst_33 = arith.constant 0.000000e+00 : f32
      %69 = vector.broadcast %cst_33 : f32 to vector<8x5xf32>
      %c0_34 = arith.constant 0 : index
      %c0_35 = arith.constant 0 : index
      %70 = vector.load %arg8[%c0_34, %c0_35] : memref<8x5xf32, #tpu.memory_space<vmem>>, vector<8x5xf32>
      tpu.vector_store %arg8[%c0_34, %c0_35], %69 {strides = array<i32>} : memref<8x5xf32, #tpu.memory_space<vmem>>, vector<8x5xf32>,
    } else {
    }
    %c0 = arith.constant 0 : index
    %c0_1 = arith.constant 0 : index
    %3 = vector.load %arg2[%c0, %c0_1] : memref<8x144xf32, #tpu.memory_space<vmem>>, vector<8x144xf32>
    %c0_2 = arith.constant 0 : index
    %c0_3 = arith.constant 0 : index
    %4 = vector.load %arg3[%c0_2, %c0_3] : memref<8x5xf32, #tpu.memory_space<vmem>>, vector<8x5xf32>
    %5 = vector.extract_strided_slice %3 {offsets = [0, 0], sizes = [8, 72], strides = [1, 1]} : vector<8x144xf32> to vector<8x72xf32>
    %6 = vector.extract_strided_slice %3 {offsets = [0, 72], sizes = [8, 72], strides = [1, 1]} : vector<8x144xf32> to vector<8x72xf32>
    %c2_i32 = arith.constant 2 : i32
    %7 = arith.muli %arg0, %c2_i32 : i32
    %8 = arith.addi %7, %arg1 : i32
    %c8_i32 = arith.constant 8 : i32
    %9 = arith.muli %8, %c8_i32 : i32
    %10 = tpu.iota {dimensions = array<i32: 0>} : vector<8x1xi32>
    %11 = vector.broadcast %9 : i32 to vector<8x1xi32>
    %12 = arith.addi %11, %10 : vector<8x1xi32>
    %c7_i32 = arith.constant 7 : i32
    %13 = vector.broadcast %c7_i32 : i32 to vector<8x1xi32>
    %14 = arith.andi %12, %13 : vector<8x1xi32>
    %c0_i32_4 = arith.constant 0 : i32
    %15 = vector.broadcast %c0_i32_4 : i32 to vector<8x1xi32>
    %16 = arith.cmpi eq, %14, %15 : vector<8x1xi32>
    %c1_i32 = arith.constant 1 : i32
    %17 = tpu.dynamic_rotate %5 by %c1_i32 dim 0 : vector<8x72xf32>, i32 -> vector<8x72xf32>
    %18 = arith.subf %5, %17 : vector<8x72xf32>
    %cst = arith.constant 0.000000e+00 : f32
    %19 = vector.shape_cast %16 : vector<8x1xi1> to vector<8x1xi1>
    %20 = vector.broadcast %19 : vector<8x1xi1> to vector<8x72xi1>
    %21 = vector.broadcast %cst : f32 to vector<8x72xf32>
    %22 = arith.select %20, %21, %18 : vector<8x72xi1>, vector<8x72xf32>
    %c0_5 = arith.constant 0 : index
    %c0_6 = arith.constant 0 : index
    %23 = vector.load %arg4[%c0_5, %c0_6] : memref<2x72xf32, #tpu.memory_space<vmem>>, vector<1x72xf32>
    %24 = vector.broadcast %23 : vector<1x72xf32> to vector<8x72xf32>
    %25 = arith.mulf %22, %24 : vector<8x72xf32>
    %c1 = arith.constant 1 : index
    %c0_7 = arith.constant 0 : index
    %26 = vector.load %arg4[%c1, %c0_7] : memref<2x72xf32, #tpu.memory_space<vmem>>, vector<1x72xf32>
    %27 = vector.broadcast %26 : vector<1x72xf32> to vector<8x72xf32>
    %28 = arith.addf %25, %27 : vector<8x72xf32>
    %cst_8 = arith.constant 0.000000e+00 : f32
    %29 = vector.shape_cast %16 : vector<8x1xi1> to vector<8x1xi1>
    %30 = vector.broadcast %29 : vector<8x1xi1> to vector<8x72xi1>
    %31 = vector.broadcast %cst_8 : f32 to vector<8x72xf32>
    %32 = arith.select %30, %31, %28 : vector<8x72xi1>, vector<8x72xf32>
    %33 = arith.subf %6, %32 : vector<8x72xf32>
    %cst_9 = arith.constant 0.138888896 : f32
    %cst_10 = arith.constant 0.00992063526 : f32
    %34 = vector.broadcast %cst_9 : f32 to vector<8x1xf32>
    %35 = vector.broadcast %cst_10 : f32 to vector<8x1xf32>
    %36 = arith.select %16, %34, %35 : vector<8x1xi1>, vector<8x1xf32>
    %37 = arith.mulf %33, %33 : vector<8x72xf32>
    %38 = vector.broadcast %36 : vector<8x1xf32> to vector<8x72xf32>
    %39 = arith.mulf %37, %38 : vector<8x72xf32>
    %40 = arith.mulf %22, %22 : vector<8x72xf32>
    %c0_11 = arith.constant 0 : index
    %c0_12 = arith.constant 0 : index
    %41 = vector.load %arg5[%c0_11, %c0_12] : memref<72x24xf32, #tpu.memory_space<vmem>>, vector<72x24xf32>
    %cst_13 = arith.constant dense<0.000000e+00> : vector<8x24xf32>
    %42 = tpu.matmul %40, %41, %cst_13 {dimension_numbers = #tpu.dot_dimension_numbers<[1], [0], [0], [1], [0, 0, 1, 1], [], []>} : vector<8x72xf32>, vector<72x24xf32>, vector<8x24xf32> -> vector<8x24xf32>
    %43 = math.sqrt %42 : vector<8x24xf32>
    %c0_14 = arith.constant 0 : index
    %c0_15 = arith.constant 0 : index
    %44 = vector.load %arg6[%c0_14, %c0_15] : memref<25x5xf32, #tpu.memory_space<vmem>>, vector<24x5xf32>
    %cst_16 = arith.constant dense<0.000000e+00> : vector<8x5xf32>
    %45 = tpu.matmul %43, %44, %cst_16 {dimension_numbers = #tpu.dot_dimension_numbers<[1], [0], [0], [1], [0, 0, 1, 1], [], []>} : vector<8x24xf32>, vector<24x5xf32>, vector<8x5xf32> -> vector<8x5xf32>
    %c24 = arith.constant 24 : index
    %c0_17 = arith.constant 0 : index
    %46 = vector.load %arg6[%c24, %c0_17] : memref<25x5xf32, #tpu.memory_space<vmem>>, vector<1x5xf32>
    %47 = vector.broadcast %46 : vector<1x5xf32> to vector<8x5xf32>
    %48 = arith.addf %45, %47 : vector<8x5xf32>
    %49 = arith.subf %4, %48 : vector<8x5xf32>
    %50 = arith.mulf %49, %49 : vector<8x5xf32>
    %cst_18 = arith.constant 0.107142858 : f32
    %51 = vector.broadcast %cst_18 : f32 to vector<8x5xf32>
    %52 = arith.mulf %50, %51 : vector<8x5xf32>
    %cst_19 = arith.constant 0.000000e+00 : f32
    %53 = vector.shape_cast %16 : vector<8x1xi1> to vector<8x1xi1>
    %54 = vector.broadcast %53 : vector<8x1xi1> to vector<8x5xi1>
    %55 = vector.broadcast %cst_19 : f32 to vector<8x5xf32>
    %56 = arith.select %54, %55, %52 : vector<8x5xi1>, vector<8x5xf32>
    %c0_20 = arith.constant 0 : index
    %c0_21 = arith.constant 0 : index
    %57 = vector.load %arg7[%c0_20, %c0_21] : memref<8x72xf32, #tpu.memory_space<vmem>>, vector<8x72xf32>
    %58 = vector.shape_cast %39 : vector<8x72xf32> to vector<1x8x72xf32>
    %cst_22 = arith.constant dense<0.000000e+00> : vector<8x72xf32>
    %59 = vector.multi_reduction <add>, %58, %cst_22 [0] : vector<1x8x72xf32> to vector<8x72xf32>
    %60 = arith.addf %57, %59 : vector<8x72xf32>
    %c0_23 = arith.constant 0 : index
    %c0_24 = arith.constant 0 : index
    %61 = vector.load %arg7[%c0_23, %c0_24] : memref<8x72xf32, #tpu.memory_space<vmem>>, vector<8x72xf32>
    tpu.vector_store %arg7[%c0_23, %c0_24], %60 {strides = array<i32>} : memref<8x72xf32, #tpu.memory_space<vmem>>, vector<8x72xf32>,
    %c0_25 = arith.constant 0 : index
    %c0_26 = arith.constant 0 : index
    %62 = vector.load %arg8[%c0_25, %c0_26] : memref<8x5xf32, #tpu.memory_space<vmem>>, vector<8x5xf32>
    %63 = vector.shape_cast %56 : vector<8x5xf32> to vector<1x8x5xf32>
    %cst_27 = arith.constant dense<0.000000e+00> : vector<8x5xf32>
    %64 = vector.multi_reduction <add>, %63, %cst_27 [0] : vector<1x8x5xf32> to vector<8x5xf32>
    %65 = arith.addf %62, %64 : vector<8x5xf32>
    %c0_28 = arith.constant 0 : index
    %c0_29 = arith.constant 0 : index
    %66 = vector.load %arg8[%c0_28, %c0_29] : memref<8x5xf32, #tpu.memory_space<vmem>>, vector<8x5xf32>
    tpu.vector_store %arg8[%c0_28, %c0_29], %65 {strides = array<i32>} : memref<8x5xf32, #tpu.memory_space<vmem>>, vector<8x5xf32>,
    return
  }
  func.func @transform_0(%arg0: i32, %arg1: i32) -> (i32, i32) {
    %c2_i32 = arith.constant 2 : i32
    %0 = arith.muli %arg0, %c2_i32 : i32
    %1 = arith.addi %0, %arg1 : i32
    %c0_i32 = arith.constant 0 : i32
    %c0_i32_0 = arith.constant 0 : i32
    return %1, %c0_i32 : i32, i32
  }
  func.func @transform_1(%arg0: i32, %arg1: i32) -> (i32, i32) {
    %c2_i32 = arith.constant 2 : i32
    %0 = arith.muli %arg0, %c2_i32 : i32
    %1 = arith.addi %0, %arg1 : i32
    %c0_i32 = arith.constant 0 : i32
    %c0_i32_0 = arith.constant 0 : i32
    return %1, %c0_i32 : i32, i32
  }
  func.func @transform_2(%arg0: i32, %arg1: i32) -> (i32, i32) {
    %c0_i32 = arith.constant 0 : i32
    %c0_i32_0 = arith.constant 0 : i32
    %c0_i32_1 = arith.constant 0 : i32
    return %c0_i32, %c0_i32_0 : i32, i32
  }
  func.func @transform_3(%arg0: i32, %arg1: i32) -> (i32, i32) {
    %c0_i32 = arith.constant 0 : i32
    %c0_i32_0 = arith.constant 0 : i32
    %c0_i32_1 = arith.constant 0 : i32
    return %c0_i32, %c0_i32_0 : i32, i32
  }
  func.func @transform_4(%arg0: i32, %arg1: i32) -> (i32, i32) {
    %c0_i32 = arith.constant 0 : i32
    %c0_i32_0 = arith.constant 0 : i32
    %c0_i32_1 = arith.constant 0 : i32
    return %c0_i32, %c0_i32_0 : i32, i32
  }
  func.func @transform_5(%arg0: i32, %arg1: i32) -> (i32, i32) {
    %c0_i32 = arith.constant 0 : i32
    %c0_i32_0 = arith.constant 0 : i32
    return %arg0, %c0_i32 : i32, i32
  }
  func.func @transform_6(%arg0: i32, %arg1: i32) -> (i32, i32) {
    %c0_i32 = arith.constant 0 : i32
    %c0_i32_0 = arith.constant 0 : i32
    return %arg0, %c0_i32 : i32, i32
  }
}

</mosaic_0001>

<llo_original>
// kernel: velocity_loss.1
$region0: #{velocity_loss.1}
  #allocation0 [shape = 'u32[]', space=smem, size = 0x4, offset = 0x4, fixed_abs, tag = 'smem constant byte address 0x4 - core index']
  #allocation1 [shape = 'u32[144,128]{1,0:T(1,128)}', space=vmem, size = 0x12000, scoped, tag = 'internal scratch']
  %s0 = inlined_call_operand.vmem [shape: f32[32,144], index: 0, kind: input, shape index: {}]
  %s1 = inlined_call_operand.vmem [shape: f32[32,5], index: 1, kind: input, shape index: {}]
  %s2 = inlined_call_operand.vmem [shape: f32[2,72], index: 2, kind: input, shape index: {}]
  %s3 = inlined_call_operand.vmem [shape: f32[72,24], index: 3, kind: input, shape index: {}]
  %s4 = inlined_call_operand.vmem [shape: f32[25,5], index: 4, kind: input, shape index: {}]
  %s5 = inlined_call_operand.vmem [shape: f32[16,72], index: 5, kind: output, shape index: {0}]
  %s6 = inlined_call_operand.vmem [shape: f32[16,5], index: 6, kind: output, shape index: {1}]
  %7 = xla_tuple %s5, %s6
  %s8 = sld [smem:[#allocation0]]
  $region65: #{velocity_loss.1} parent=0
    _
  %s10 = ssub.s32 1, %s8
  %s11 = scalar_select 0, %s10, %s8
  loop: start=0, step=1, limit=6
  $region2: #{velocity_loss.1} parent=0 // loop_pre_header
    _
  $region3: #{velocity_loss.1} parent=0 // loop_header
    %s13 = sphi 0, %s17
    %p14 = scmp.ge.s32.totalorder %s13, 6
    %s20 = sphi 0, %s32
    %s21 = sphi 0, %s28
    %s22 = sphi 0, %s20
    %s23 = sphi 0, %s21
    %s24 = sphi 0, %s22
    %s25 = sphi 0, %s23
    %s39 = sphi 0, %s41
    %s42 = sphi 0, %s39
    %s43 = sphi 0, %s42
    %s59 = sphi 0, %s43
    %s69 = sphi 0, %s71
    %s72 = sphi 0, %s69
    %s73 = sphi 0, %s72
    %s89 = sphi 0, %s73
    %s93 = sphi 0, %s93
    %s95 = sphi 0, %s93
    %s96 = sphi 0, %s95
    %s110 = sphi 0, %s96
    %s114 = sphi 0, %s114
    %s116 = sphi 0, %s114
    %s117 = sphi 0, %s116
    %s131 = sphi 0, %s117
    %s135 = sphi 0, %s135
    %s137 = sphi 0, %s135
    %s138 = sphi 0, %s137
    %s152 = sphi 0, %s138
    %s158 = sphi 0, %s160
    %s161 = sphi 0, %s158
    %s162 = sphi 0, %s161
    %s178 = sphi 0, %s162
    %s184 = sphi 0, %s186
    %s187 = sphi 0, %s184
    %s188 = sphi 0, %s187
    %s204 = sphi 0, %s188
  $region4: #{velocity_loss.1} parent=0 // loop_header_branch
    %16 = sbr.rel (%p14) target = $region8
  $region5: #{velocity_loss.1} parent=0 // loop_body
    %s18 = ssub.s32 %s13, 1
    %s19 = ssub.s32 %s13, 2
    %s26 = sadd.s32 1, %s21
    %p27 = scmp.ge.s32.totalorder %s26, 2
    %s28 = scalar_select %p27, 0, %s26
    %s29 = sadd.s32 1, %s20
    %s30 = scalar_select %p27, %s29, %s20
    %p31 = scmp.ge.s32.totalorder %s30, 2
    %s32 = scalar_select %p31, 0, %s30
    %s33 = smul.u32 %s20, 2
    %s34 = sadd.s32 %s33, %s21
    %s35 = smul.u32 %s32, 2
    %s36 = sadd.s32 %s35, %s28
    %s37 = ssub.s32 %s34, %s36
    %p38 = scmp.eq.s32.totalorder %s37, 0
    %s40 = sadd.s32 %s39, 1
    %s41 = scalar_select %p38, %s39, %s40
    %p44 = pneg %p38
    %p45 = scmp.eq.s32.totalorder %s13, 3
    %p46 = por %p44, %p45
    %p47 = scmp.ne.s32.totalorder %s39, %s42
    %p48 = scmp.eq.s32.totalorder %s13, 0
    %p49 = por %p47, %p48
    %p50 = scmp.ne.s32.totalorder %s39, %s42
    %p51 = scmp.eq.s32.totalorder %s18, 3
    %p52 = por %p50, %p51
    %p53 = scmp.ne.s32.totalorder %s42, %s43
    %p54 = scmp.eq.s32.totalorder %s18, 0
    %p55 = por %p53, %p54
    %p56 = scmp.ne.s32.totalorder %s42, %s43
    %p57 = scmp.eq.s32.totalorder %s19, 3
    %p58 = por %p56, %p57
    %p60 = scmp.ne.s32.totalorder %s43, %s59
    %p61 = scmp.eq.s32.totalorder %s19, 0
    %p62 = por %p60, %p61
    %s63 = smul.u32 %s20, 2
    %s64 = sadd.s32 %s63, %s21
    %s65 = smul.u32 %s32, 2
    %s66 = sadd.s32 %s65, %s28
    %s67 = ssub.s32 %s64, %s66
    %p68 = scmp.eq.s32.totalorder %s67, 0
    %s70 = sadd.s32 %s69, 1
    %s71 = scalar_select %p68, %s69, %s70
    %p74 = pneg %p68
    %p75 = scmp.eq.s32.totalorder %s13, 3
    %p76 = por %p74, %p75
    %p77 = scmp.ne.s32.totalorder %s69, %s72
    %p78 = scmp.eq.s32.totalorder %s13, 0
    %p79 = por %p77, %p78
    %p80 = scmp.ne.s32.totalorder %s69, %s72
    %p81 = scmp.eq.s32.totalorder %s18, 3
    %p82 = por %p80, %p81
    %p83 = scmp.ne.s32.totalorder %s72, %s73
    %p84 = scmp.eq.s32.totalorder %s18, 0
    %p85 = por %p83, %p84
    %p86 = scmp.ne.s32.totalorder %s72, %s73
    %p87 = scmp.eq.s32.totalorder %s19, 3
    %p88 = por %p86, %p87
    %p90 = scmp.ne.s32.totalorder %s73, %s89
    %p91 = scmp.eq.s32.totalorder %s19, 0
    %p92 = por %p90, %p91
    %s94 = sadd.s32 %s93, 1
    %p97 = scmp.eq.s32.totalorder %s13, 3
    %p98 = scmp.ne.s32.totalorder %s93, %s95
    %p99 = scmp.eq.s32.totalorder %s13, 0
    %p100 = por %p98, %p99
    %p101 = scmp.ne.s32.totalorder %s93, %s95
    %p102 = scmp.eq.s32.totalorder %s18, 3
    %p103 = por %p101, %p102
    %p104 = scmp.ne.s32.totalorder %s95, %s96
    %p105 = scmp.eq.s32.totalorder %s18, 0
    %p106 = por %p104, %p105
    %p107 = scmp.ne.s32.totalorder %s95, %s96
    %p108 = scmp.eq.s32.totalorder %s19, 3
    %p109 = por %p107, %p108
    %p111 = scmp.ne.s32.totalorder %s96, %s110
    %p112 = scmp.eq.s32.totalorder %s19, 0
    %p113 = por %p111, %p112
    %s115 = sadd.s32 %s114, 1
    %p118 = scmp.eq.s32.totalorder %s13, 3
    %p119 = scmp.ne.s32.totalorder %s114, %s116
    %p120 = scmp.eq.s32.totalorder %s13, 0
    %p121 = por %p119, %p120
    %p122 = scmp.ne.s32.totalorder %s114, %s116
    %p123 = scmp.eq.s32.totalorder %s18, 3
    %p124 = por %p122, %p123
    %p125 = scmp.ne.s32.totalorder %s116, %s117
    %p126 = scmp.eq.s32.totalorder %s18, 0
    %p127 = por %p125, %p126
    %p128 = scmp.ne.s32.totalorder %s116, %s117
    %p129 = scmp.eq.s32.totalorder %s19, 3
    %p130 = por %p128, %p129
    %p132 = scmp.ne.s32.totalorder %s117, %s131
    %p133 = scmp.eq.s32.totalorder %s19, 0
    %p134 = por %p132, %p133
    %s136 = sadd.s32 %s135, 1
    %p139 = scmp.eq.s32.totalorder %s13, 3
    %p140 = scmp.ne.s32.totalorder %s135, %s137
    %p141 = scmp.eq.s32.totalorder %s13, 0
    %p142 = por %p140, %p141
    %p143 = scmp.ne.s32.totalorder %s135, %s137
    %p144 = scmp.eq.s32.totalorder %s18, 3
    %p145 = por %p143, %p144
    %p146 = scmp.ne.s32.totalorder %s137, %s138
    %p147 = scmp.eq.s32.totalorder %s18, 0
    %p148 = por %p146, %p147
    %p149 = scmp.ne.s32.totalorder %s137, %s138
    %p150 = scmp.eq.s32.totalorder %s19, 3
    %p151 = por %p149, %p150
    %p153 = scmp.ne.s32.totalorder %s138, %s152
    %p154 = scmp.eq.s32.totalorder %s19, 0
    %p155 = por %p153, %p154
    %s156 = ssub.s32 %s20, %s32
    %p157 = scmp.eq.s32.totalorder %s156, 0
    %s159 = sadd.s32 %s158, 1
    %s160 = scalar_select %p157, %s158, %s159
    %p163 = pneg %p157
    %p164 = scmp.eq.s32.totalorder %s13, 3
    %p165 = por %p163, %p164
    %p166 = scmp.ne.s32.totalorder %s158, %s161
    %p167 = scmp.eq.s32.totalorder %s13, 0
    %p168 = por %p166, %p167
    %p169 = scmp.ne.s32.totalorder %s158, %s161
    %p170 = scmp.eq.s32.totalorder %s18, 3
    %p171 = por %p169, %p170
    %p172 = scmp.ne.s32.totalorder %s161, %s162
    %p173 = scmp.eq.s32.totalorder %s18, 0
    %p174 = por %p172, %p173
    %p175 = scmp.ne.s32.totalorder %s161, %s162
    %p176 = scmp.eq.s32.totalorder %s19, 3
    %p177 = por %p175, %p176
    %p179 = scmp.ne.s32.totalorder %s162, %s178
    %p180 = scmp.eq.s32.totalorder %s19, 0
    %p181 = por %p179, %p180
    %s182 = ssub.s32 %s20, %s32
    %p183 = scmp.eq.s32.totalorder %s182, 0
    %s185 = sadd.s32 %s184, 1
    %s186 = scalar_select %p183, %s184, %s185
    %p189 = pneg %p183
    %p190 = scmp.eq.s32.totalorder %s13, 3
    %p191 = por %p189, %p190
    %p192 = scmp.ne.s32.totalorder %s184, %s187
    %p193 = scmp.eq.s32.totalorder %s13, 0
    %p194 = por %p192, %p193
    %p195 = scmp.ne.s32.totalorder %s184, %s187
    %p196 = scmp.eq.s32.totalorder %s18, 3
    %p197 = por %p195, %p196
    %p198 = scmp.ne.s32.totalorder %s187, %s188
    %p199 = scmp.eq.s32.totalorder %s18, 0
    %p200 = por %p198, %p199
    %p201 = scmp.ne.s32.totalorder %s187, %s188
    %p202 = scmp.eq.s32.totalorder %s19, 3
    %p203 = por %p201, %p202
    %p205 = scmp.ne.s32.totalorder %s188, %s204
    %p206 = scmp.eq.s32.totalorder %s19, 0
    %p207 = por %p205, %p206
    %p208 = scmp.le.s32.totalorder 1, %s13
    %p209 = scmp.lt.s32.totalorder %s13, 5
    %p210 = pnand %p208, %p209
    %p211 = pneg %p210
    // Predicated region
    $region9: #{velocity_loss.1} parent=5 // pred_check
      _
    $region10: #{velocity_loss.1} parent=5 // pred_check_branch
      %213 = sbr.rel (%p210) target = $region12
    $region11: #{velocity_loss.1} parent=5 // pred_region
      %s214 = ssub.s32 %s13, 1
      // Predicated region
      $region13: #{velocity_loss.1} parent=11 // pred_check
        %p215 = pneg %p106
      $region14: #{velocity_loss.1} parent=11 // pred_check_branch
        %217 = sbr.rel (%p215) target = $region16
      $region15: #{velocity_loss.1} parent=11 // pred_region
        _
      $region16: #{velocity_loss.1} parent=11 // pred_fallthru
        _
      // Predicated region
      $region17: #{velocity_loss.1} parent=11 // pred_check
        %p218 = pneg %p127
      $region18: #{velocity_loss.1} parent=11 // pred_check_branch
        %220 = sbr.rel (%p218) target = $region20
      $region19: #{velocity_loss.1} parent=11 // pred_region
        _
      $region20: #{velocity_loss.1} parent=11 // pred_fallthru
        _
      // Predicated region
      $region21: #{velocity_loss.1} parent=11 // pred_check
        %p221 = pneg %p148
      $region22: #{velocity_loss.1} parent=11 // pred_check_branch
        %223 = sbr.rel (%p221) target = $region24
      $region23: #{velocity_loss.1} parent=11 // pred_region
        _
      $region24: #{velocity_loss.1} parent=11 // pred_fallthru
        _
    $region12: #{velocity_loss.1} parent=5 // pred_fallthru
      _
    %p224 = scmp.lt.s32.totalorder %s13, 4
    // Predicated region
    $region25: #{velocity_loss.1} parent=5 // pred_check
      %p225 = pneg %p224
    $region26: #{velocity_loss.1} parent=5 // pred_check_branch
      %227 = sbr.rel (%p225) target = $region28
    $region27: #{velocity_loss.1} parent=5 // pred_region
      // Predicated region
      $region29: #{velocity_loss.1} parent=27 // pred_check
        %p228 = pneg %p49
      $region30: #{velocity_loss.1} parent=27 // pred_check_branch
        %230 = sbr.rel (%p228) target = $region32
      $region31: #{velocity_loss.1} parent=27 // pred_region
        %s231 = smul.u32 %s20, 2
        %s232 = sadd.s32 %s231, %s21
        %p233 = scmp.lt.s32.totalorder %s232, 3
        %s234 = scalar_select %p233, %s232, 3
        %s235 = smul.addr %s234, 2
        %s236 = smul.addr %s235, 8
        %s237 = scalar_lea.vmem %s0, %s236
        %s238 = smul.u32 %s20, 2
        %s239 = sadd.s32 %s238, %s21
      $region32: #{velocity_loss.1} parent=27 // pred_fallthru
        _
      // Predicated region
      $region33: #{velocity_loss.1} parent=27 // pred_check
        %p240 = pneg %p79
      $region34: #{velocity_loss.1} parent=27 // pred_check_branch
        %242 = sbr.rel (%p240) target = $region36
      $region35: #{velocity_loss.1} parent=27 // pred_region
        %s243 = smul.u32 %s20, 2
        %s244 = sadd.s32 %s243, %s21
        %p245 = scmp.lt.s32.totalorder %s244, 3
        %s246 = scalar_select %p245, %s244, 3
        %s247 = smul.addr %s246, 8
        %s248 = scalar_lea.vmem %s1, %s247
        %s249 = smul.u32 %s20, 2
        %s250 = sadd.s32 %s249, %s21
      $region36: #{velocity_loss.1} parent=27 // pred_fallthru
        _
    $region28: #{velocity_loss.1} parent=5 // pred_fallthru
      _
    %p251 = scmp.le.s32.totalorder 1, %s13
    %p252 = scmp.lt.s32.totalorder %s13, 5
    %p253 = pnand %p251, %p252
    %p254 = pneg %p253
    // Predicated region
    $region37: #{velocity_loss.1} parent=5 // pred_check
      _
    $region38: #{velocity_loss.1} parent=5 // pred_check_branch
      %256 = sbr.rel (%p253) target = $region40
    $region39: #{velocity_loss.1} parent=5 // pred_region
      %s257 = ssub.s32 %s13, 1
      %s258 = smul.u32 %s22, 2
      %s259 = sadd.s32 %s258, %s23
      %p260 = scmp.lt.s32.totalorder %s259, 3
      %s261 = scalar_select %p260, %s259, 3
      %s262 = smul.addr %s261, 2
      %s263 = smul.addr %s262, 8
      %s264 = scalar_lea.vmem %s0, %s263
      %p265 = pneg %p55
      %p266 = pneg %p52
      %s267 = smul.u32 %s22, 2
      %s268 = sadd.s32 %s267, %s23
      %p269 = scmp.lt.s32.totalorder %s268, 3
      %s270 = scalar_select %p269, %s268, 3
      %s271 = smul.addr %s270, 8
      %s272 = scalar_lea.vmem %s1, %s271
      %p273 = pneg %p85
      %p274 = pneg %p82
      %p275 = pneg %p106
      %p276 = pneg %p103
      %p277 = pneg %p127
      %p278 = pneg %p124
      %p279 = pneg %p148
      %p280 = pneg %p145
      %p281 = pneg %p174
      %p282 = pneg %p171
      %p283 = scmp.lt.s32.totalorder %s22, 1
      %s284 = scalar_select %p283, %s22, 1
      %s285 = smul.addr %s284, 8
      %s286 = scalar_lea.vmem %s5, %s285
      %p287 = pneg %p200
      %p288 = pneg %p197
      %p289 = scmp.lt.s32.totalorder %s22, 1
      %s290 = scalar_select %p289, %s22, 1
      %s291 = smul.addr %s290, 8
      %s292 = scalar_lea.vmem %s6, %s291
      %s293 = smul.u32 %s22, 2
      %s294 = sadd.s32 %s293, %s23
      %p295 = scmp.lt.s32.totalorder %s294, 3
      %s296 = scalar_select %p295, %s294, 3
      %s297 = smul.addr %s296, 2
      %s298 = smul.addr %s297, 8
      %s299 = scalar_lea.vmem %s0, %s298
      %s300 = smul.u32 %s22, 2
      %s301 = sadd.s32 %s300, %s23
      %s302 = smul.u32 %s22, 2
      %s303 = sadd.s32 %s302, %s23
      %p304 = scmp.lt.s32.totalorder %s303, 3
      %s305 = scalar_select %p304, %s303, 3
      %s306 = smul.addr %s305, 8
      %s307 = scalar_lea.vmem %s1, %s306
      %s308 = smul.u32 %s22, 2
      %s309 = sadd.s32 %s308, %s23
      %p310 = scmp.lt.s32.totalorder %s22, 1
      %s311 = scalar_select %p310, %s22, 1
      %s312 = smul.addr %s311, 8
      %s313 = scalar_lea.vmem %s5, %s312
      %p314 = scmp.lt.s32.totalorder %s22, 1
      %s315 = scalar_select %p314, %s22, 1
      %s316 = smul.addr %s315, 8
      %s317 = scalar_lea.vmem %s6, %s316
      %p318 = scmp.eq.s32.totalorder %s23, 0
      // Predicated region
      $region41: #{velocity_loss.1} parent=39 // pred_check
        %p319 = pneg %p318
      $region42: #{velocity_loss.1} parent=39 // pred_check_branch
        %321 = sbr.rel (%p319) target = $region44
      $region43: #{velocity_loss.1} parent=39 // pred_region
        %vm322 = vcmask 588800
        %323 = vst.msk [vmem:[%s313] sm:$0xff] %vm322, 0.0
        %vm324 = vcmask 39936
        %325 = vst.msk [vmem:[%s317] sm:$0xff] %vm324, 0.0
      $region44: #{velocity_loss.1} parent=39 // pred_fallthru
        _
      %v326 = vld [vmem:[%s299] sm:$0xff]
      %v327 = vld [vmem:[%s299 + $0x8] sm:$0xff]
      %v328 = vld [vmem:[%s307] sm:$0xff]
      %s329 = smul.u32 %s22, 2
      %s330 = sadd.s32 %s329, %s23
      %s331 = smul.u32 %s330, 8
      %v332 = vlaneseq
      %v333 = vshrl.u32 %v332, 7
      %v334 = vstv %s331
      %v335 = vadd.s32 %v334, %v333
      %v336 = vand.u32 %v335, 7
      %vm337 = vcmp.eq.s32.totalorder %v336, 0
      %v338 = vrot.slane %v326, 7
      %v339 = vsub.f32 %v326, %v338
      %v340 = vsel %vm337, 1, 0
      %vm341 = vcmp.eq.s32.totalorder %v340, 1
      %v342 = vsel %vm341, 0.0, %v339
      %v343 = vld [vmem:[%s2] sm:$0x1]
      %v344 = vlaneseq
      %v345 = vshrl.u32 %v344, 7
      %v346 = vsub.s32 0, %v345
      %v347 = vrot.slane %v343, %v346
      %v348 = vmul.f32 %v342, %v347
      %v349 = vld [vmem:[%s2 + $0x1] sm:$0x1]
      %v350 = vlaneseq
      %v351 = vshrl.u32 %v350, 7
      %v352 = vsub.s32 0, %v351
      %v353 = vrot.slane %v349, %v352
      %v354 = vadd.f32 %v348, %v353
      %v355 = vsel %vm341, 0.0, %v354
      %357 = vrot.lane.b32.xlu0 %v355, 72
      %v358 = vpop.permute.xlu0 %357
      %v360 = vsub.f32 %v326, %v358
      %v361 = vsub.f32 %v327, %v358
      %v362 = vsel %vm337, 0.1388889, 0.009920635
      %v363 = vmul.f32 %v360, %v360
      %v364 = vmul.f32 %v361, %v361
      %v365 = vmul.f32 %v363, %v362
      %v366 = vmul.f32 %v364, %v362
      %v367 = vmul.f32 %v342, %v342
      %v368 = vld [vmem:[%s3] sm:$0xff]
      %v369 = vld [vmem:[%s3 + $0x8] sm:$0xff]
      %v370 = vld [vmem:[%s3 + $0x10] sm:$0xff]
      %v371 = vld [vmem:[%s3 + $0x18] sm:$0xff]
      %v372 = vld [vmem:[%s3 + $0x20] sm:$0xff]
      %v373 = vld [vmem:[%s3 + $0x28] sm:$0xff]
      %v374 = vld [vmem:[%s3 + $0x30] sm:$0xff]
      %v375 = vld [vmem:[%s3 + $0x38] sm:$0xff]
      %v376 = vld [vmem:[%s3 + $0x40] sm:$0xff]
      %vm377 = vcmask 588800
      %v379 = vsel %vm377, %v367, 0
      %381 = vmatprep.subr.mxu0 0.0
      %382 = vmatpush1.msra.mxu0 0.0
      %383 = vmatprep.subr.mxu0 0.0
      %384 = vmatpush1.msra.mxu0 0.0
      %385 = vmatprep.subr.mxu0 0.0
      %386 = vmatpush1.msra.mxu0 0.0
      %387 = vmatprep.subr.mxu0 0.0
      %388 = vmatpush1.msra.mxu0 0.0
      %389 = vmatprep.subr.mxu0 0.0
      %390 = vmatpush1.msra.mxu0 0.0
      %391 = vmatprep.subr.mxu0 0.0
      %392 = vmatpush1.msra.mxu0 0.0
      %393 = vmatprep.subr.mxu0 0.0
      %394 = vmatpush1.msra.mxu0 0.0
      %395 = vmatprep.subr.mxu0 0.0
      %396 = vmatpush1.msra.mxu0 %v376
      %397 = vmatprep.subr.mxu0 0.0
      %398 = vmatpush1.msra.mxu0 %v375
      %399 = vmatprep.subr.mxu0 0.0
      %400 = vmatpush1.msra.mxu0 %v374
      %401 = vmatprep.subr.mxu0 0.0
      %402 = vmatpush1.msra.mxu0 %v373
      %403 = vmatprep.subr.mxu0 0.0
      %404 = vmatpush1.msra.mxu0 %v372
      %405 = vmatprep.subr.mxu0 0.0
      %406 = vmatpush1.msra.mxu0 %v371
      %407 = vmatprep.subr.mxu0 0.0
      %408 = vmatpush1.msra.mxu0 %v370
      %409 = vmatprep.subr.mxu0 0.0
      %410 = vmatpush1.msra.mxu0 %v369
      %411 = vmatprep.subr.mxu0 0.0
      %412 = vmatpush1.msra.mxu0 %v368
      %413 = vmatprep.subr.mxu0 0.0
      %414 = vmatpush2.msra.mxu0 0.0
      %415 = vmatprep.subr.mxu0 0.0
      %416 = vmatpush2.msra.mxu0 0.0
      %417 = vmatprep.subr.mxu0 0.0
      %418 = vmatpush2.msra.mxu0 0.0
      %419 = vmatprep.subr.mxu0 0.0
      %420 = vmatpush2.msra.mxu0 0.0
      %421 = vmatprep.subr.mxu0 0.0
      %422 = vmatpush2.msra.mxu0 0.0
      %423 = vmatprep.subr.mxu0 0.0
      %424 = vmatpush2.msra.mxu0 0.0
      %425 = vmatprep.subr.mxu0 0.0
      %426 = vmatpush2.msra.mxu0 0.0
      %427 = vmatprep.subr.mxu0 0.0
      %428 = vmatpush2.msra.mxu0 0.0
      %429 = vmatprep.subr.mxu0 0.0
      %430 = vmatpush2.msra.mxu0 0.0
      %431 = vmatprep.subr.mxu0 0.0
      %432 = vmatpush2.msra.mxu0 0.0
      %433 = vmatprep.subr.mxu0 0.0
      %434 = vmatpush2.msra.mxu0 0.0
      %435 = vmatprep.subr.mxu0 0.0
      %436 = vmatpush2.msra.mxu0 0.0
      %437 = vmatprep.subr.mxu0 0.0
      %438 = vmatpush2.msra.mxu0 0.0
      %439 = vmatprep.subr.mxu0 0.0
      %440 = vmatpush2.msra.mxu0 0.0
      %441 = vmatprep.subr.mxu0 0.0
      %442 = vmatpush2.msra.mxu0 0.0
      %443 = vmatprep.subr.mxu0 0.0
      %444 = vmatpush2.msra.mxu0 0.0
      %445 = vmatprep.mubr.f32.mxu0 0.0
      %446 = vmatmul.mubr.f32.gmra.mxu0 %v379
      %v447 = vpop.f32.mrf.mxu0
      %v448 = vadd.f32 0.0, %v447
      %v449 = vpop.f32.mrf.mxu0
      %450 = vdwg.mxu0
      %v451 = vrsqrt.pop %v448
      %v452 = vmul.f32 %v448, %v451
      %vm453 = vcmp.eq.f32.partialorder %v448, inf
      %v454 = vsel %vm453, %v448, %v452
      %vm455 = vcmp.eq.f32.partialorder %v448, 0.0
      %v456 = vand.u32 %v448, 2147483648
      %v457 = vsel %vm455, %v456, %v454
      %v458 = vld [vmem:[%s4] sm:$0xff]
      %v459 = vld [vmem:[%s4 + $0x8] sm:$0xff]
      %v460 = vld [vmem:[%s4 + $0x10] sm:$0xff]
      %v461 = vld [vmem:[%s4 + $0x18] sm:$0x1]
      %v462 = vlaneseq
      %v463 = vshrl.u32 %v462, 7
      %v464 = vsub.s32 0, %v463
      %v465 = vrot.slane %v461, %v464
      %vm466 = vcmask 195584
      %v468 = vsel %vm466, %v457, 0
      %470 = vmatprep.subr.mxu0 0.0
      %471 = vmatpush1.msra.mxu0 0.0
      %472 = vmatprep.subr.mxu0 0.0
      %473 = vmatpush1.msra.mxu0 0.0
      %474 = vmatprep.subr.mxu0 0.0
      %475 = vmatpush1.msra.mxu0 0.0
      %476 = vmatprep.subr.mxu0 0.0
      %477 = vmatpush1.msra.mxu0 0.0
      %478 = vmatprep.subr.mxu0 0.0
      %479 = vmatpush1.msra.mxu0 0.0
      %480 = vmatprep.subr.mxu0 0.0
      %481 = vmatpush1.msra.mxu0 0.0
      %482 = vmatprep.subr.mxu0 0.0
      %483 = vmatpush1.msra.mxu0 0.0
      %484 = vmatprep.subr.mxu0 0.0
      %485 = vmatpush1.msra.mxu0 0.0
      %486 = vmatprep.subr.mxu0 0.0
      %487 = vmatpush1.msra.mxu0 0.0
      %488 = vmatprep.subr.mxu0 0.0
      %489 = vmatpush1.msra.mxu0 0.0
      %490 = vmatprep.subr.mxu0 0.0
      %491 = vmatpush1.msra.mxu0 0.0
      %492 = vmatprep.subr.mxu0 0.0
      %493 = vmatpush1.msra.mxu0 0.0
      %494 = vmatprep.subr.mxu0 0.0
      %495 = vmatpush1.msra.mxu0 0.0
      %496 = vmatprep.subr.mxu0 0.0
      %497 = vmatpush1.msra.mxu0 %v460
      %498 = vmatprep.subr.mxu0 0.0
      %499 = vmatpush1.msra.mxu0 %v459
      %500 = vmatprep.subr.mxu0 0.0
      %501 = vmatpush1.msra.mxu0 %v458
      %502 = vmatprep.subr.mxu0 0.0
      %503 = vmatpush2.msra.mxu0 0.0
      %504 = vmatprep.subr.mxu0 0.0
      %505 = vmatpush2.msra.mxu0 0.0
      %506 = vmatprep.subr.mxu0 0.0
      %507 = vmatpush2.msra.mxu0 0.0
      %508 = vmatprep.subr.mxu0 0.0
      %509 = vmatpush2.msra.mxu0 0.0
      %510 = vmatprep.subr.mxu0 0.0
      %511 = vmatpush2.msra.mxu0 0.0
      %512 = vmatprep.subr.mxu0 0.0
      %513 = vmatpush2.msra.mxu0 0.0
      %514 = vmatprep.subr.mxu0 0.0
      %515 = vmatpush2.msra.mxu0 0.0
      %516 = vmatprep.subr.mxu0 0.0
      %517 = vmatpush2.msra.mxu0 0.0
      %518 = vmatprep.subr.mxu0 0.0
      %519 = vmatpush2.msra.mxu0 0.0
      %520 = vmatprep.subr.mxu0 0.0
      %521 = vmatpush2.msra.mxu0 0.0
      %522 = vmatprep.subr.mxu0 0.0
      %523 = vmatpush2.msra.mxu0 0.0
      %524 = vmatprep.subr.mxu0 0.0
      %525 = vmatpush2.msra.mxu0 0.0
      %526 = vmatprep.subr.mxu0 0.0
      %527 = vmatpush2.msra.mxu0 0.0
      %528 = vmatprep.subr.mxu0 0.0
      %529 = vmatpush2.msra.mxu0 0.0
      %530 = vmatprep.subr.mxu0 0.0
      %531 = vmatpush2.msra.mxu0 0.0
      %532 = vmatprep.subr.mxu0 0.0
      %533 = vmatpush2.msra.mxu0 0.0
      %534 = vmatprep.mubr.f32.mxu0 0.0
      %535 = vmatmul.mubr.f32.gmra.mxu0 %v468
      %v536 = vpop.f32.mrf.mxu0
      %v537 = vadd.f32 %v465, %v536
      %v538 = vpop.f32.mrf.mxu0
      %539 = vdwg.mxu0
      %v540 = vsub.f32 %v328, %v537
      %v541 = vmul.f32 %v540, %v540
      %v542 = vmul.f32 %v541, 0.10714286
      %v543 = vsel %vm341, 0.0, %v542
      %v544 = vld [vmem:[%s313] sm:$0xff]
      %v545 = vadd.f32 %v365, 0.0
      %v546 = vadd.f32 %v366, 0.0
      %549 = vrot.lane.b32.xlu0 %v545, 56
      %v550 = vpop.permute.xlu0 %549
      %551 = vrot.lane.b32.xlu0 %v546, 56
      %v552 = vpop.permute.xlu0 %551
      %vm553 = vcmask 457728
      %v554 = vsel %vm553, %v550, %v552
      %v556 = vadd.f32 %v544, %v554
      %557 = vst.msk [vmem:[%s313] sm:$0xff] %vm377, %v556
      %v558 = vld [vmem:[%s317] sm:$0xff]
      %v559 = vadd.f32 %v543, 0.0
      %v560 = vadd.f32 %v558, %v559
      %vm561 = vcmask 39936
      %562 = vst.msk [vmem:[%s317] sm:$0xff] %vm561, %v560
      %p563 = scmp.lt.s32.totalorder %s22, 1
      %s564 = scalar_select %p563, %s22, 1
      %s565 = smul.addr %s564, 8
      %s566 = scalar_lea.vmem %s5, %s565
      %p567 = scmp.lt.s32.totalorder %s22, 1
      %s568 = scalar_select %p567, %s22, 1
      %s569 = smul.addr %s568, 8
      %s570 = scalar_lea.vmem %s6, %s569
      // Predicated region
      $region45: #{velocity_loss.1} parent=39 // pred_check
        %p571 = pneg %p171
      $region46: #{velocity_loss.1} parent=39 // pred_check_branch
        %573 = sbr.rel (%p571) target = $region48
      $region47: #{velocity_loss.1} parent=39 // pred_region
        _
      $region48: #{velocity_loss.1} parent=39 // pred_fallthru
        _
      // Predicated region
      $region49: #{velocity_loss.1} parent=39 // pred_check
        %p574 = pneg %p197
      $region50: #{velocity_loss.1} parent=39 // pred_check_branch
        %576 = sbr.rel (%p574) target = $region52
      $region51: #{velocity_loss.1} parent=39 // pred_region
        _
      $region52: #{velocity_loss.1} parent=39 // pred_fallthru
        _
    $region40: #{velocity_loss.1} parent=5 // pred_fallthru
      _
    %p577 = scmp.le.s32.totalorder 2, %s13
    // Predicated region
    $region53: #{velocity_loss.1} parent=5 // pred_check
      %p578 = pneg %p577
    $region54: #{velocity_loss.1} parent=5 // pred_check_branch
      %580 = sbr.rel (%p578) target = $region56
    $region55: #{velocity_loss.1} parent=5 // pred_region
      %s581 = ssub.s32 %s13, 2
      // Predicated region
      $region57: #{velocity_loss.1} parent=55 // pred_check
        %p582 = pneg %p177
      $region58: #{velocity_loss.1} parent=55 // pred_check_branch
        %584 = sbr.rel (%p582) target = $region60
      $region59: #{velocity_loss.1} parent=55 // pred_region
        %p585 = scmp.lt.s32.totalorder %s24, 1
        %s586 = scalar_select %p585, %s24, 1
        %s587 = smul.addr %s586, 8
        %s588 = scalar_lea.vmem %s5, %s587
      $region60: #{velocity_loss.1} parent=55 // pred_fallthru
        _
      // Predicated region
      $region61: #{velocity_loss.1} parent=55 // pred_check
        %p589 = pneg %p203
      $region62: #{velocity_loss.1} parent=55 // pred_check_branch
        %591 = sbr.rel (%p589) target = $region64
      $region63: #{velocity_loss.1} parent=55 // pred_region
        %p592 = scmp.lt.s32.totalorder %s24, 1
        %s593 = scalar_select %p592, %s24, 1
        %s594 = smul.addr %s593, 8
        %s595 = scalar_lea.vmem %s6, %s594
      $region64: #{velocity_loss.1} parent=55 // pred_fallthru
        _
    $region56: #{velocity_loss.1} parent=5 // pred_fallthru
      _
  $region6: #{velocity_loss.1} parent=0 // loop_footer
    %s17 = sadd.s32 1, %s13
  $region7: #{velocity_loss.1} parent=0 // loop_footer_branch
    %12 = sbr.rel target = $region3
  $region8: #{velocity_loss.1} parent=0 // loop_exit
    _

</llo_original>
